<compile_context>
chip_gen: v7x
topology: tpu7x:2x2x1
jax: 0.10.0
libtpu: 0.0.40
codegen_flags: <defaults>
</compile_context>

<pallas_src>
import functools
import math

import jax
import jax.numpy as jnp
from jax.experimental import pallas as pl
from jax.experimental.pallas import tpu as pltpu

H1, H2 = 16, 32  # hidden sizes fixed by the PyTorch module


def _round_up(x, m):
    return -(-x // m) * m


def _pack_factor(s, o):
    """Smallest K such that K*s and K*o are both multiples of 128 lanes."""
    k1 = 128 // math.gcd(128, s)
    k2 = 128 // math.gcd(128, o)
    return k1 * k2 // math.gcd(k1, k2)


# ----------------------------------------------------------------------------
# Shared in-kernel math: (rows, S) -> (rows, 2A) holding [mean | std] lanes.
# ----------------------------------------------------------------------------
def _mlp(x, w1_ref, w2_ref, wh_ref, bpack_ref):
    a2 = wh_ref.shape[1]
    bpack = bpack_ref[...]                                   # (1, H1+H2+3*2A)
    b1 = bpack[:, 0:H1]
    b2 = bpack[:, H1:H1 + H2]
    bh = bpack[:, H1 + H2:H1 + H2 + a2]                      # [bm | bs]
    ah = bpack[:, H1 + H2 + a2:H1 + H2 + 2 * a2]             # action_high, 0-padded
    mean_mask = bpack[:, H1 + H2 + 2 * a2:H1 + H2 + 3 * a2] > 0.5

    h1 = jnp.maximum(
        jnp.dot(x, w1_ref[...], preferred_element_type=jnp.float32) + b1, 0.0)
    h2 = jnp.maximum(
        jnp.dot(h1, w2_ref[...], preferred_element_type=jnp.float32) + b2, 0.0)
    head = jnp.dot(h2, wh_ref[...], preferred_element_type=jnp.float32) + bh

    # Lane-mask blend instead of slice + concat: mean lanes get
    # action_high * tanh, std lanes get log(1+exp(.)) (exactly the torch code).
    return jnp.where(mean_mask, ah * jnp.tanh(head), jnp.log1p(jnp.exp(head)))


# ----------------------------------------------------------------------------
# General kernel: natural (rows, S) -> (rows, 2A) layout (any batch size).
# ----------------------------------------------------------------------------
def _actor_kernel_plain(x_ref, w1_ref, w2_ref, wh_ref, bpack_ref, out_ref):
    out_ref[...] = _mlp(x_ref[...], w1_ref, w2_ref, wh_ref, bpack_ref)


# ----------------------------------------------------------------------------
# Lane-dense kernel: input block (TP, K*S) and output block (TP, K*2A), where
# each packed row holds K consecutive batch rows.  Unpack/repack is done with
# static slices + concatenate only (guaranteed to lower on TPU).
# ----------------------------------------------------------------------------
def _actor_kernel_packed(xp_ref, w1_ref, w2_ref, wh_ref, bpack_ref, out_ref, *,
                         K, S):
    tp = xp_ref.shape[0]
    xp = xp_ref[...]                                          # (TP, K*S) dense load
    # Unpack to (TP*K, S).  Row order becomes g-major (a per-tile batch
    # permutation) which is irrelevant for a row-wise MLP; the output repack
    # below uses the exact inverse mapping.
    x = jnp.concatenate([xp[:, g * S:(g + 1) * S] for g in range(K)], axis=0)

    out = _mlp(x, w1_ref, w2_ref, wh_ref, bpack_ref)          # (TP*K, 2A)

    # Repack to (TP, K*2A): out_packed[p, g*2A + c] == row (K*p + g), col c.
    out_ref[...] = jnp.concatenate(
        [out[g * tp:(g + 1) * tp, :] for g in range(K)], axis=1)


# ----------------------------------------------------------------------------
# Wrappers
# ----------------------------------------------------------------------------
def _forward_plain(x, params, *, tile_b):
    B, S = x.shape
    a2 = params["w_head"].shape[1]
    bw = params["b_pack"].shape[1]

    tile_b = max(8, (tile_b // 8) * 8)
    if B > tile_b:
        TB = tile_b
    elif B % 8 == 0 and B >= 16:
        # split into >=2 grid steps so "parallel" can use both v7x TensorCores
        TB = min(tile_b, _round_up(pl.cdiv(B, 2), 8))
    else:
        TB = B  # single full-extent block (no padding needed)

    return pl.pallas_call(
        _actor_kernel_plain,
        out_shape=jax.ShapeDtypeStruct((B, a2), jnp.float32),
        grid=(pl.cdiv(B, TB),),
        in_specs=[
            pl.BlockSpec((TB, S), lambda i: (i, 0)),          # x tile
            pl.BlockSpec((S, H1), lambda i: (0, 0)),          # W1 (resident)
            pl.BlockSpec((H1, H2), lambda i: (0, 0)),         # W2 (resident)
            pl.BlockSpec((H2, a2), lambda i: (0, 0)),         # [Wm|Ws]
            pl.BlockSpec((1, bw), lambda i: (0, 0)),          # bias/ah/mask pack
        ],
        out_specs=pl.BlockSpec((TB, a2), lambda i: (i, 0)),
        compiler_params=pltpu.CompilerParams(
            dimension_semantics=("parallel",),
            vmem_limit_bytes=32 * 1024 * 1024),
    )(x, params["w1"], params["w2"], params["w_head"], params["b_pack"])


def _forward_packed(x, params, *, K, tile_b):
    B, S = x.shape
    a2 = params["w_head"].shape[1]
    bw = params["b_pack"].shape[1]

    P = B // K                                   # packed rows; P % 8 == 0 here
    xp = x.reshape(P, K * S)                     # free row-major repack (no copy)

    tp_target = max(8, ((tile_b // K) // 8) * 8)
    if P > tp_target:
        TP = tp_target
    elif P >= 16:
        TP = min(tp_target, _round_up(pl.cdiv(P, 2), 8))   # >=2 steps for v7x
    else:
        TP = P

    kernel = functools.partial(_actor_kernel_packed, K=K, S=S)
    outp = pl.pallas_call(
        kernel,
        out_shape=jax.ShapeDtypeStruct((P, K * a2), jnp.float32),
        grid=(pl.cdiv(P, TP),),
        in_specs=[
            pl.BlockSpec((TP, K * S), lambda i: (i, 0)),      # lane-dense x tile
            pl.BlockSpec((S, H1), lambda i: (0, 0)),
            pl.BlockSpec((H1, H2), lambda i: (0, 0)),
            pl.BlockSpec((H2, a2), lambda i: (0, 0)),
            pl.BlockSpec((1, bw), lambda i: (0, 0)),
        ],
        out_specs=pl.BlockSpec((TP, K * a2), lambda i: (i, 0)),  # lane-dense out
        compiler_params=pltpu.CompilerParams(
            dimension_semantics=("parallel",),
            vmem_limit_bytes=32 * 1024 * 1024),
    )(xp, params["w1"], params["w2"], params["w_head"], params["b_pack"])

    return outp.reshape(B, a2)                   # free row-major unpack (no copy)


def actor_net_forward(x, params, *, tile_b=2048):
    """x: (B, state_dim). Returns (mean, std), each (B, action_dim)."""
    x = x.astype(jnp.float32)                    # matches torch's x.float()
    B, S = x.shape
    a2 = params["w_head"].shape[1]
    A = a2 // 2
    K = _pack_factor(S, a2)

    use_packed = (B % (8 * K) == 0) and (K * S <= 512) and (K * a2 <= 512)
    if use_packed:
        out = _forward_packed(x, params, K=K, tile_b=tile_b)
    else:
        out = _forward_plain(x, params, tile_b=tile_b)
    return out[:, :A], out[:, A:]


# ----------------------------------------------------------------------------
# Parameters & pure-JAX reference
# ----------------------------------------------------------------------------
def init_params(key, state_dim, action_dim, action_high):
    ks = jax.random.split(key, 8)

    def lin(kw, kb, fan_in, fan_out):
        bound = 1.0 / math.sqrt(fan_in)
        w = jax.random.uniform(kw, (fan_in, fan_out), jnp.float32, -bound, bound)
        b = jax.random.uniform(kb, (1, fan_out), jnp.float32, -bound, bound)
        return w, b

    w1, b1 = lin(ks[0], ks[1], state_dim, H1)
    w2, b2 = lin(ks[2], ks[3], H1, H2)
    wm, bm = lin(ks[4], ks[5], H2, action_dim)
    ws, bs = lin(ks[6], ks[7], H2, action_dim)
    ah = jnp.asarray(action_high, jnp.float32).reshape(1, action_dim)

    zeros = jnp.zeros((1, action_dim), jnp.float32)
    ones = jnp.ones((1, action_dim), jnp.float32)
    ah_pad = jnp.concatenate([ah, zeros], axis=1)         # (1, 2A)
    mean_mask = jnp.concatenate([ones, zeros], axis=1)    # (1, 2A)

    return {
        # packed params consumed by the kernels
        "w1": w1,
        "w2": w2,
        "w_head": jnp.concatenate([wm, ws], axis=1),                      # (H2, 2A)
        "b_pack": jnp.concatenate([b1, b2, bm, bs, ah_pad, mean_mask], axis=1),
        # unpacked copies kept only for the pure-JAX reference check
        "b1": b1, "b2": b2, "wm": wm, "bm": bm, "ws": ws, "bs": bs,
        "action_high": ah,
    }


def actor_net_reference(x, p):
    x = x.astype(jnp.float32)
    h1 = jnp.maximum(x @ p["w1"] + p["b1"], 0.0)
    h2 = jnp.maximum(h1 @ p["w2"] + p["b2"], 0.0)
    mean = p["action_high"] * jnp.tanh(h2 @ p["wm"] + p["bm"])
    std = jnp.log1p(jnp.exp(h2 @ p["ws"] + p["bs"]))
    return mean, std


if __name__ == "__main__":
    key = jax.random.PRNGKey(0)
    k_x, k_p, k_x2 = jax.random.split(key, 3)

    state_dim, action_dim = 4, 2
    action_high = [2.0, 1.0]
    params = init_params(k_p, state_dim, action_dim, action_high)

    # Small demo batch (general-path kernel) and a larger batch divisible by
    # 8*K = 256 that exercises the lane-dense packed kernel.
    x_small = jax.random.normal(k_x, (8, state_dim), jnp.float32)
    x_big = jax.random.normal(k_x2, (1024, state_dim), jnp.float32)

    for x in (x_small, x_big):
        mean, std = actor_net_forward(x, params)
        mean = jax.block_until_ready(mean)
        std = jax.block_until_ready(std)

        ref_mean, ref_std = actor_net_reference(x, params)
        assert mean.shape == (x.shape[0], action_dim)
        assert std.shape == (x.shape[0], action_dim)
        assert jnp.allclose(mean, ref_mean, atol=1e-5, rtol=1e-5)
        assert jnp.allclose(std, ref_std, atol=1e-5, rtol=1e-5)
        assert bool(jnp.all(std > 0.0))
        assert bool(jnp.all(jnp.isfinite(mean))) and bool(jnp.all(jnp.isfinite(std)))

    print("KERNEL_OK")
</pallas_src>

<mosaic_0001>
module attributes {stable_mosaic.version = 11 : i64} {
  func.func @_actor_kernel_plain(%arg0: i32, %arg1: memref<8x4xf32, #tpu.memory_space<vmem>>, %arg2: memref<4x16xf32, #tpu.memory_space<vmem>>, %arg3: memref<16x32xf32, #tpu.memory_space<vmem>>, %arg4: memref<32x4xf32, #tpu.memory_space<vmem>>, %arg5: memref<1x60xf32, #tpu.memory_space<vmem>>, %arg6: memref<8x4xf32, #tpu.memory_space<vmem>>) attributes {dimension_semantics = [#tpu.dimension_semantics<parallel>], iteration_bounds = array<i64: 1>, scalar_prefetch = 0 : i64, scratch_operands = 0 : i64, tpu.core_type = #tpu.core_type<tc>, window_params = [{transform_indices = @transform_0, window_bounds = array<i64: 8, 4>}, {pipeline_mode = #tpu.pipeline_mode<synchronous>, transform_indices = @transform_1, window_bounds = array<i64: 4, 16>}, {pipeline_mode = #tpu.pipeline_mode<synchronous>, transform_indices = @transform_2, window_bounds = array<i64: 16, 32>}, {pipeline_mode = #tpu.pipeline_mode<synchronous>, transform_indices = @transform_3, window_bounds = array<i64: 32, 4>}, {pipeline_mode = #tpu.pipeline_mode<synchronous>, transform_indices = @transform_4, window_bounds = array<i64: 1, 60>}, {transform_indices = @transform_5, window_bounds = array<i64: 8, 4>}]} {
    %c0 = arith.constant 0 : index
    %c0_0 = arith.constant 0 : index
    %0 = vector.load %arg1[%c0, %c0_0] : memref<8x4xf32, #tpu.memory_space<vmem>>, vector<8x4xf32>
    %c0_1 = arith.constant 0 : index
    %c0_2 = arith.constant 0 : index
    %1 = vector.load %arg5[%c0_1, %c0_2] : memref<1x60xf32, #tpu.memory_space<vmem>>, vector<1x60xf32>
    %2 = vector.extract_strided_slice %1 {offsets = [0, 0], sizes = [1, 16], strides = [1, 1]} : vector<1x60xf32> to vector<1x16xf32>
    %3 = vector.extract_strided_slice %1 {offsets = [0, 16], sizes = [1, 32], strides = [1, 1]} : vector<1x60xf32> to vector<1x32xf32>
    %4 = vector.extract_strided_slice %1 {offsets = [0, 48], sizes = [1, 4], strides = [1, 1]} : vector<1x60xf32> to vector<1x4xf32>
    %5 = vector.extract_strided_slice %1 {offsets = [0, 52], sizes = [1, 4], strides = [1, 1]} : vector<1x60xf32> to vector<1x4xf32>
    %6 = vector.extract_strided_slice %1 {offsets = [0, 56], sizes = [1, 4], strides = [1, 1]} : vector<1x60xf32> to vector<1x4xf32>
    %cst = arith.constant 5.000000e-01 : f32
    %7 = vector.broadcast %cst : f32 to vector<1x4xf32>
    %8 = arith.cmpf ogt, %6, %7 : vector<1x4xf32>
    %c0_3 = arith.constant 0 : index
    %c0_4 = arith.constant 0 : index
    %9 = vector.load %arg2[%c0_3, %c0_4] : memref<4x16xf32, #tpu.memory_space<vmem>>, vector<4x16xf32>
    %cst_5 = arith.constant dense<0.000000e+00> : vector<8x16xf32>
    %10 = tpu.matmul %0, %9, %cst_5 {dimension_numbers = #tpu.dot_dimension_numbers<[1], [0], [0], [1], [0, 0, 1, 1], [], []>} : vector<8x4xf32>, vector<4x16xf32>, vector<8x16xf32> -> vector<8x16xf32>
    %11 = vector.broadcast %2 : vector<1x16xf32> to vector<8x16xf32>
    %12 = arith.addf %10, %11 : vector<8x16xf32>
    %cst_6 = arith.constant 0.000000e+00 : f32
    %13 = vector.broadcast %cst_6 : f32 to vector<8x16xf32>
    %14 = arith.maximumf %12, %13 : vector<8x16xf32>
    %c0_7 = arith.constant 0 : index
    %c0_8 = arith.constant 0 : index
    %15 = vector.load %arg3[%c0_7, %c0_8] : memref<16x32xf32, #tpu.memory_space<vmem>>, vector<16x32xf32>
    %cst_9 = arith.constant dense<0.000000e+00> : vector<8x32xf32>
    %16 = tpu.matmul %14, %15, %cst_9 {dimension_numbers = #tpu.dot_dimension_numbers<[1], [0], [0], [1], [0, 0, 1, 1], [], []>} : vector<8x16xf32>, vector<16x32xf32>, vector<8x32xf32> -> vector<8x32xf32>
    %17 = vector.broadcast %3 : vector<1x32xf32> to vector<8x32xf32>
    %18 = arith.addf %16, %17 : vector<8x32xf32>
    %cst_10 = arith.constant 0.000000e+00 : f32
    %19 = vector.broadcast %cst_10 : f32 to vector<8x32xf32>
    %20 = arith.maximumf %18, %19 : vector<8x32xf32>
    %c0_11 = arith.constant 0 : index
    %c0_12 = arith.constant 0 : index
    %21 = vector.load %arg4[%c0_11, %c0_12] : memref<32x4xf32, #tpu.memory_space<vmem>>, vector<32x4xf32>
    %cst_13 = arith.constant dense<0.000000e+00> : vector<8x4xf32>
    %22 = tpu.matmul %20, %21, %cst_13 {dimension_numbers = #tpu.dot_dimension_numbers<[1], [0], [0], [1], [0, 0, 1, 1], [], []>} : vector<8x32xf32>, vector<32x4xf32>, vector<8x4xf32> -> vector<8x4xf32>
    %23 = vector.broadcast %4 : vector<1x4xf32> to vector<8x4xf32>
    %24 = arith.addf %22, %23 : vector<8x4xf32>
    %25 = math.tanh %24 : vector<8x4xf32>
    %26 = vector.broadcast %5 : vector<1x4xf32> to vector<8x4xf32>
    %27 = arith.mulf %26, %25 : vector<8x4xf32>
    %28 = math.exp %24 : vector<8x4xf32>
    %29 = math.log1p %28 : vector<8x4xf32>
    %30 = vector.shape_cast %8 : vector<1x4xi1> to vector<1x4xi1>
    %31 = vector.broadcast %30 : vector<1x4xi1> to vector<8x4xi1>
    %32 = arith.select %31, %27, %29 : vector<8x4xi1>, vector<8x4xf32>
    %c0_14 = arith.constant 0 : index
    %c0_15 = arith.constant 0 : index
    %33 = vector.load %arg6[%c0_14, %c0_15] : memref<8x4xf32, #tpu.memory_space<vmem>>, vector<8x4xf32>
    tpu.vector_store %arg6[%c0_14, %c0_15], %32 {strides = array<i32>} : memref<8x4xf32, #tpu.memory_space<vmem>>, vector<8x4xf32>,
    return
  }
  func.func @transform_0(%arg0: i32) -> (i32, i32) {
    %c0_i32 = arith.constant 0 : i32
    %c0_i32_0 = arith.constant 0 : i32
    return %arg0, %c0_i32 : i32, i32
  }
  func.func @transform_1(%arg0: i32) -> (i32, i32) {
    %c0_i32 = arith.constant 0 : i32
    %c0_i32_0 = arith.constant 0 : i32
    %c0_i32_1 = arith.constant 0 : i32
    return %c0_i32, %c0_i32_0 : i32, i32
  }
  func.func @transform_2(%arg0: i32) -> (i32, i32) {
    %c0_i32 = arith.constant 0 : i32
    %c0_i32_0 = arith.constant 0 : i32
    %c0_i32_1 = arith.constant 0 : i32
    return %c0_i32, %c0_i32_0 : i32, i32
  }
  func.func @transform_3(%arg0: i32) -> (i32, i32) {
    %c0_i32 = arith.constant 0 : i32
    %c0_i32_0 = arith.constant 0 : i32
    %c0_i32_1 = arith.constant 0 : i32
    return %c0_i32, %c0_i32_0 : i32, i32
  }
  func.func @transform_4(%arg0: i32) -> (i32, i32) {
    %c0_i32 = arith.constant 0 : i32
    %c0_i32_0 = arith.constant 0 : i32
    %c0_i32_1 = arith.constant 0 : i32
    return %c0_i32, %c0_i32_0 : i32, i32
  }
  func.func @transform_5(%arg0: i32) -> (i32, i32) {
    %c0_i32 = arith.constant 0 : i32
    %c0_i32_0 = arith.constant 0 : i32
    return %arg0, %c0_i32 : i32, i32
  }
}

</mosaic_0001>

<llo_original>
// kernel: tpu_custom_call.1
$region0: #{tpu_custom_call.1}
  #allocation0 [shape = 'u32[]', space=smem, size = 0x4, offset = 0x4, fixed_abs, tag = 'smem constant byte address 0x4 - core index']
  #allocation1 [shape = 'u32[144,128]{1,0:T(1,128)}', space=vmem, size = 0x12000, scoped, tag = 'internal scratch']
  %s0 = inlined_call_operand.vmem [shape: f32[8,4], index: 0, kind: input, shape index: {}]
  %s1 = inlined_call_operand.vmem [shape: f32[4,16], index: 1, kind: input, shape index: {}]
  %s2 = inlined_call_operand.vmem [shape: f32[16,32], index: 2, kind: input, shape index: {}]
  %s3 = inlined_call_operand.vmem [shape: f32[32,4], index: 3, kind: input, shape index: {}]
  %s4 = inlined_call_operand.vmem [shape: f32[1,60], index: 4, kind: input, shape index: {}]
  %s5 = inlined_call_operand.vmem [shape: f32[8,4], index: 5, kind: output, shape index: {}]
  %s6 = sld [smem:[#allocation0]]
  $region30: #{tpu_custom_call.1} parent=0
    _
  %s8 = ssub.s32 1, %s6
  %s9 = scalar_select 0, %s8, %s6
  // Predicated region
  $region2: #{tpu_custom_call.1} parent=0 // pred_check
    _
  $region3: #{tpu_custom_call.1} parent=0 // pred_check_branch
    %11 = sbr.rel (0) target = $region5
  $region4: #{tpu_custom_call.1} parent=0 // pred_region
    _
  $region5: #{tpu_custom_call.1} parent=0 // pred_fallthru
    _
  // Predicated region
  $region6: #{tpu_custom_call.1} parent=0 // pred_check
    _
  $region7: #{tpu_custom_call.1} parent=0 // pred_check_branch
    %13 = sbr.rel (0) target = $region9
  $region8: #{tpu_custom_call.1} parent=0 // pred_region
    _
  $region9: #{tpu_custom_call.1} parent=0 // pred_fallthru
    _
  // Predicated region
  $region10: #{tpu_custom_call.1} parent=0 // pred_check
    _
  $region11: #{tpu_custom_call.1} parent=0 // pred_check_branch
    %15 = sbr.rel (0) target = $region13
  $region12: #{tpu_custom_call.1} parent=0 // pred_region
    _
  $region13: #{tpu_custom_call.1} parent=0 // pred_fallthru
    _
  // Predicated region
  $region14: #{tpu_custom_call.1} parent=0 // pred_check
    _
  $region15: #{tpu_custom_call.1} parent=0 // pred_check_branch
    %17 = sbr.rel (0) target = $region17
  $region16: #{tpu_custom_call.1} parent=0 // pred_region
    _
  $region17: #{tpu_custom_call.1} parent=0 // pred_fallthru
    _
  // Predicated region
  $region18: #{tpu_custom_call.1} parent=0 // pred_check
    _
  $region19: #{tpu_custom_call.1} parent=0 // pred_check_branch
    %19 = sbr.rel (0) target = $region21
  $region20: #{tpu_custom_call.1} parent=0 // pred_region
    _
  $region21: #{tpu_custom_call.1} parent=0 // pred_fallthru
    _
  %v20 = vld [vmem:[%s0] sm:$0xff]
  %v21 = vld [vmem:[%s4] sm:$0x1]
  %vm22 = vcmp.gt.f32.partialorder %v21, 0.5
  %v23 = vld [vmem:[%s1] sm:$0xf]
  %v25 = vlaneseq
  %v26 = vshrl.u32 %v25, 7
  %v27 = vsub.s32 0, %v26
  %v28 = vrot.slane %v21, %v27
  %vm30 = vcmask 31744
  %v32 = vsel %vm30, %v20, 0
  %vm34 = vcmask 1043456
  %v36 = vsel %vm34, %v23, 0
  %38 = vmatprep.subr.mxu0 0.0
  %39 = vmatpush1.msra.mxu0 %v36
  %40 = vmatprep.subr.mxu0 0.0
  %41 = vmatpush1.msra.mxu0 0.0
  %42 = vmatprep.subr.mxu0 0.0
  %43 = vmatpush1.msra.mxu0 0.0
  %44 = vmatprep.subr.mxu0 0.0
  %45 = vmatpush1.msra.mxu0 0.0
  %46 = vmatprep.subr.mxu0 0.0
  %47 = vmatpush1.msra.mxu0 0.0
  %48 = vmatprep.subr.mxu0 0.0
  %49 = vmatpush1.msra.mxu0 0.0
  %50 = vmatprep.subr.mxu0 0.0
  %51 = vmatpush1.msra.mxu0 0.0
  %52 = vmatprep.subr.mxu0 0.0
  %53 = vmatpush1.msra.mxu0 0.0
  %54 = vmatprep.subr.mxu0 0.0
  %55 = vmatpush1.msra.mxu0 0.0
  %56 = vmatprep.subr.mxu0 0.0
  %57 = vmatpush1.msra.mxu0 0.0
  %58 = vmatprep.subr.mxu0 0.0
  %59 = vmatpush1.msra.mxu0 0.0
  %60 = vmatprep.subr.mxu0 0.0
  %61 = vmatpush1.msra.mxu0 0.0
  %62 = vmatprep.subr.mxu0 0.0
  %63 = vmatpush1.msra.mxu0 0.0
  %64 = vmatprep.subr.mxu0 0.0
  %65 = vmatpush1.msra.mxu0 0.0
  %66 = vmatprep.subr.mxu0 0.0
  %67 = vmatpush1.msra.mxu0 0.0
  %68 = vmatprep.subr.mxu0 0.0
  %69 = vmatpush1.msra.mxu0 0.0
  %70 = vmatprep.subr.mxu0 0.0
  %71 = vmatpush1.msra.mxu0 0.0
  %72 = vmatprep.subr.mxu0 0.0
  %73 = vmatpush1.msra.mxu0 0.0
  %74 = vmatprep.subr.mxu0 0.0
  %75 = vmatpush1.msra.mxu0 0.0
  %76 = vmatprep.subr.mxu0 0.0
  %77 = vmatpush1.msra.mxu0 0.0
  %78 = vmatprep.subr.mxu0 0.0
  %79 = vmatpush1.msra.mxu0 0.0
  %80 = vmatprep.subr.mxu0 0.0
  %81 = vmatpush1.msra.mxu0 0.0
  %82 = vmatprep.subr.mxu0 0.0
  %83 = vmatpush1.msra.mxu0 0.0
  %84 = vmatprep.subr.mxu0 0.0
  %85 = vmatpush1.msra.mxu0 0.0
  %86 = vmatprep.subr.mxu0 0.0
  %87 = vmatpush1.msra.mxu0 0.0
  %88 = vmatprep.subr.mxu0 0.0
  %89 = vmatpush1.msra.mxu0 0.0
  %90 = vmatprep.subr.mxu0 0.0
  %91 = vmatpush1.msra.mxu0 0.0
  %92 = vmatprep.subr.mxu0 0.0
  %93 = vmatpush1.msra.mxu0 0.0
  %94 = vmatprep.subr.mxu0 0.0
  %95 = vmatpush1.msra.mxu0 0.0
  %96 = vmatprep.subr.mxu0 0.0
  %97 = vmatpush1.msra.mxu0 0.0
  %98 = vmatprep.subr.mxu0 0.0
  %99 = vmatpush1.msra.mxu0 0.0
  %100 = vmatprep.subr.mxu0 0.0
  %101 = vmatpush1.msra.mxu0 0.0
  %102 = vmatprep.mubr.f32.mxu0 0.0
  %103 = vmatmul.mubr.f32.gmra.mrb[0].mxu0 %v32
  %v104 = vpop.f32.mrb[0].mxu0
  %v105 = vadd.f32 %v28, %v104
  %v106 = vpop.f32.mrb[0].mxu0
  %107 = vdwg.mxu0
  %v108 = vmax.f32 %v105, 0.0
  %v109 = vld [vmem:[%s2] sm:$0xff]
  %v110 = vld [vmem:[%s2 + $0x8] sm:$0xff]
  %111 = vrot.lane.b32.xlu0 %v28, 112
  %v112 = vpop.permute.xlu0 %111
  %vm114 = vcmask 130048
  %v116 = vsel %vm114, %v108, 0
  %118 = vmatprep.subr.mxu0 0.0
  %119 = vmatpush1.msra.mxu0 %v109
  %120 = vmatprep.subr.mxu0 0.0
  %121 = vmatpush1.msra.mxu0 %v110
  %122 = vmatprep.subr.mxu0 0.0
  %123 = vmatpush1.msra.mxu0 0.0
  %124 = vmatprep.subr.mxu0 0.0
  %125 = vmatpush1.msra.mxu0 0.0
  %126 = vmatprep.subr.mxu0 0.0
  %127 = vmatpush1.msra.mxu0 0.0
  %128 = vmatprep.subr.mxu0 0.0
  %129 = vmatpush1.msra.mxu0 0.0
  %130 = vmatprep.subr.mxu0 0.0
  %131 = vmatpush1.msra.mxu0 0.0
  %132 = vmatprep.subr.mxu0 0.0
  %133 = vmatpush1.msra.mxu0 0.0
  %134 = vmatprep.subr.mxu0 0.0
  %135 = vmatpush1.msra.mxu0 0.0
  %136 = vmatprep.subr.mxu0 0.0
  %137 = vmatpush1.msra.mxu0 0.0
  %138 = vmatprep.subr.mxu0 0.0
  %139 = vmatpush1.msra.mxu0 0.0
  %140 = vmatprep.subr.mxu0 0.0
  %141 = vmatpush1.msra.mxu0 0.0
  %142 = vmatprep.subr.mxu0 0.0
  %143 = vmatpush1.msra.mxu0 0.0
  %144 = vmatprep.subr.mxu0 0.0
  %145 = vmatpush1.msra.mxu0 0.0
  %146 = vmatprep.subr.mxu0 0.0
  %147 = vmatpush1.msra.mxu0 0.0
  %148 = vmatprep.subr.mxu0 0.0
  %149 = vmatpush1.msra.mxu0 0.0
  %150 = vmatprep.subr.mxu0 0.0
  %151 = vmatpush1.msra.mxu0 0.0
  %152 = vmatprep.subr.mxu0 0.0
  %153 = vmatpush1.msra.mxu0 0.0
  %154 = vmatprep.subr.mxu0 0.0
  %155 = vmatpush1.msra.mxu0 0.0
  %156 = vmatprep.subr.mxu0 0.0
  %157 = vmatpush1.msra.mxu0 0.0
  %158 = vmatprep.subr.mxu0 0.0
  %159 = vmatpush1.msra.mxu0 0.0
  %160 = vmatprep.subr.mxu0 0.0
  %161 = vmatpush1.msra.mxu0 0.0
  %162 = vmatprep.subr.mxu0 0.0
  %163 = vmatpush1.msra.mxu0 0.0
  %164 = vmatprep.subr.mxu0 0.0
  %165 = vmatpush1.msra.mxu0 0.0
  %166 = vmatprep.subr.mxu0 0.0
  %167 = vmatpush1.msra.mxu0 0.0
  %168 = vmatprep.subr.mxu0 0.0
  %169 = vmatpush1.msra.mxu0 0.0
  %170 = vmatprep.subr.mxu0 0.0
  %171 = vmatpush1.msra.mxu0 0.0
  %172 = vmatprep.subr.mxu0 0.0
  %173 = vmatpush1.msra.mxu0 0.0
  %174 = vmatprep.subr.mxu0 0.0
  %175 = vmatpush1.msra.mxu0 0.0
  %176 = vmatprep.subr.mxu0 0.0
  %177 = vmatpush1.msra.mxu0 0.0
  %178 = vmatprep.subr.mxu0 0.0
  %179 = vmatpush1.msra.mxu0 0.0
  %180 = vmatprep.subr.mxu0 0.0
  %181 = vmatpush1.msra.mxu0 0.0
  %182 = vmatprep.mubr.f32.mxu0 0.0
  %183 = vmatmul.mubr.f32.gmra.mrb[0].mxu0 %v116
  %v184 = vpop.f32.mrb[0].mxu0
  %v185 = vadd.f32 %v112, %v184
  %v186 = vpop.f32.mrb[0].mxu0
  %187 = vdwg.mxu0
  %v188 = vmax.f32 %v185, 0.0
  %v189 = vld [vmem:[%s3] sm:$0xff]
  %v190 = vld [vmem:[%s3 + $0x8] sm:$0xff]
  %v191 = vld [vmem:[%s3 + $0x10] sm:$0xff]
  %v192 = vld [vmem:[%s3 + $0x18] sm:$0xff]
  %193 = vrot.lane.b32.xlu0 %v28, 80
  %v194 = vpop.permute.xlu0 %193
  %vm196 = vcmask 261120
  %v198 = vsel %vm196, %v188, 0
  %200 = vmatprep.subr.mxu0 0.0
  %201 = vmatpush1.msra.mxu0 %v189
  %202 = vmatprep.subr.mxu0 0.0
  %203 = vmatpush1.msra.mxu0 %v190
  %204 = vmatprep.subr.mxu0 0.0
  %205 = vmatpush1.msra.mxu0 %v191
  %206 = vmatprep.subr.mxu0 0.0
  %207 = vmatpush1.msra.mxu0 %v192
  %208 = vmatprep.subr.mxu0 0.0
  %209 = vmatpush1.msra.mxu0 0.0
  %210 = vmatprep.subr.mxu0 0.0
  %211 = vmatpush1.msra.mxu0 0.0
  %212 = vmatprep.subr.mxu0 0.0
  %213 = vmatpush1.msra.mxu0 0.0
  %214 = vmatprep.subr.mxu0 0.0
  %215 = vmatpush1.msra.mxu0 0.0
  %216 = vmatprep.subr.mxu0 0.0
  %217 = vmatpush1.msra.mxu0 0.0
  %218 = vmatprep.subr.mxu0 0.0
  %219 = vmatpush1.msra.mxu0 0.0
  %220 = vmatprep.subr.mxu0 0.0
  %221 = vmatpush1.msra.mxu0 0.0
  %222 = vmatprep.subr.mxu0 0.0
  %223 = vmatpush1.msra.mxu0 0.0
  %224 = vmatprep.subr.mxu0 0.0
  %225 = vmatpush1.msra.mxu0 0.0
  %226 = vmatprep.subr.mxu0 0.0
  %227 = vmatpush1.msra.mxu0 0.0
  %228 = vmatprep.subr.mxu0 0.0
  %229 = vmatpush1.msra.mxu0 0.0
  %230 = vmatprep.subr.mxu0 0.0
  %231 = vmatpush1.msra.mxu0 0.0
  %232 = vmatprep.subr.mxu0 0.0
  %233 = vmatpush1.msra.mxu0 0.0
  %234 = vmatprep.subr.mxu0 0.0
  %235 = vmatpush1.msra.mxu0 0.0
  %236 = vmatprep.subr.mxu0 0.0
  %237 = vmatpush1.msra.mxu0 0.0
  %238 = vmatprep.subr.mxu0 0.0
  %239 = vmatpush1.msra.mxu0 0.0
  %240 = vmatprep.subr.mxu0 0.0
  %241 = vmatpush1.msra.mxu0 0.0
  %242 = vmatprep.subr.mxu0 0.0
  %243 = vmatpush1.msra.mxu0 0.0
  %244 = vmatprep.subr.mxu0 0.0
  %245 = vmatpush1.msra.mxu0 0.0
  %246 = vmatprep.subr.mxu0 0.0
  %247 = vmatpush1.msra.mxu0 0.0
  %248 = vmatprep.subr.mxu0 0.0
  %249 = vmatpush1.msra.mxu0 0.0
  %250 = vmatprep.subr.mxu0 0.0
  %251 = vmatpush1.msra.mxu0 0.0
  %252 = vmatprep.subr.mxu0 0.0
  %253 = vmatpush1.msra.mxu0 0.0
  %254 = vmatprep.subr.mxu0 0.0
  %255 = vmatpush1.msra.mxu0 0.0
  %256 = vmatprep.subr.mxu0 0.0
  %257 = vmatpush1.msra.mxu0 0.0
  %258 = vmatprep.subr.mxu0 0.0
  %259 = vmatpush1.msra.mxu0 0.0
  %260 = vmatprep.subr.mxu0 0.0
  %261 = vmatpush1.msra.mxu0 0.0
  %262 = vmatprep.subr.mxu0 0.0
  %263 = vmatpush1.msra.mxu0 0.0
  %264 = vmatprep.mubr.f32.mxu0 0.0
  %265 = vmatmul.mubr.f32.gmra.mrb[0].mxu0 %v198
  %v266 = vpop.f32.mrb[0].mxu0
  %v267 = vadd.f32 %v194, %v266
  %v268 = vpop.f32.mrb[0].mxu0
  %269 = vdwg.mxu0
  %v270 = vtanh.pop %v267
  %272 = vrot.lane.b32.xlu0 %v270, 52
  %v273 = vpop.permute.xlu0 %272
  %v275 = vmul.f32 %v28, %v273
  %v276 = vmul.f32 %v267, 1.442695
  %v277 = vpow.pop %v276
  %v278 = vadd.f32 %v277, 1.0
  %v279 = vlog2.pop %v278
  %v280 = vmul.f32 %v279, 0.6931472
  %v281 = vmul.f32 -0.5, %v277
  %v282 = vadd.f32 %v281, 1.0
  %v283 = vmul.f32 %v282, %v277
  %v284 = vand.u32 2147483647, %v277
  %vm285 = vcmp.lt.f32.partialorder %v284, 0.0004427343
  %v286 = vsel %vm285, %v283, %v280
  %v287 = vsel %vm22, 1, 0
  %v288 = vlaneseq
  %v289 = vshrl.u32 %v288, 7
  %v290 = vsub.s32 0, %v289
  %v291 = vrot.slane %v287, %v290
  %vm292 = vcmp.eq.s32.totalorder %v291, 1
  %294 = vrot.lane.b32.xlu0 %v275, 4
  %v295 = vpop.permute.xlu0 %294
  %298 = vrot.lane.b32.xlu0 %v286, 56
  %v299 = vpop.permute.xlu0 %298
  %v301 = vsel %vm292, %v295, %v299
  %303 = vrot.lane.b32.xlu0 %v301, 72
  %v304 = vpop.permute.xlu0 %303
  %306 = vst.msk [vmem:[%s5] sm:$0xff] %vm30, %v304
  // Predicated region
  $region22: #{tpu_custom_call.1} parent=0 // pred_check
    _
  $region23: #{tpu_custom_call.1} parent=0 // pred_check_branch
    %308 = sbr.rel (0) target = $region25
  $region24: #{tpu_custom_call.1} parent=0 // pred_region
    _
  $region25: #{tpu_custom_call.1} parent=0 // pred_fallthru
    _
  // Predicated region
  $region26: #{tpu_custom_call.1} parent=0 // pred_check
    _
  $region27: #{tpu_custom_call.1} parent=0 // pred_check_branch
    %310 = sbr.rel (0) target = $region29
  $region28: #{tpu_custom_call.1} parent=0 // pred_region
    _
  $region29: #{tpu_custom_call.1} parent=0 // pred_fallthru
    _

</llo_original>
